<compile_context>
chip_gen: v6e
topology: v6e:2x2x1
jax: 0.10.0
libtpu: 0.0.40
codegen_flags: <defaults>
</compile_context>

<pallas_src>
import jax
import jax.numpy as jnp
from jax.experimental import pallas as pl
from jax.experimental.pallas import tpu as pltpu


# ---------------------------------------------------------------------------
# Tiling helpers
# ---------------------------------------------------------------------------
def _round_up(x, m):
    return ((x + m - 1) // m) * m


def _pick_tile(dim, base, cap):
    """Largest multiple of `base` that divides `dim` and is <= cap.

    `dim` is always a multiple of `base` here (the wrapper pads), so no
    full-extent fallback is needed and blocks stay (8,128)-aligned.
    """
    best = base
    t = base
    limit = min(dim, cap)
    while t <= limit:
        if dim % t == 0:
            best = t
        t += base
    return best


def _default_tile_caps():
    """Per-generation tile caps (lanes, sublane rows) and optional VMEM limit."""
    hw_cap, bc_cap, vmem_limit = 2048, 128, None     # safe default (v5e & unknown)
    try:
        kind = jax.devices()[0].device_kind.lower()
    except Exception:  # pragma: no cover - defensive
        kind = ""
    if "v6" in kind:
        hw_cap = 4096                                # 2 MiB f32 blocks, ~12 MiB double-buffered
    elif "v7" in kind or "tpu7" in kind:
        hw_cap = 8192                                # 4 MiB f32 blocks
        bc_cap = 128
        vmem_limit = 48 << 20                        # headroom under 64 MiB physical VMEM
    return hw_cap, bc_cap, vmem_limit


# ---------------------------------------------------------------------------
# Pallas kernel: select encoded vs cover with a shared spatial keep mask
# ---------------------------------------------------------------------------
def _dropout_blend_kernel(mask_ref, enc_ref, cov_ref, out_ref):
    # mask_ref: (1, thw) int32, broadcasts over the (tbc) sublane rows.
    keep = mask_ref[...] != 0
    # Pure select (bit-exact pick of enc or cov); cheaper than mul-blend.
    out_ref[...] = jnp.where(keep, enc_ref[...], cov_ref[...])


def dropout_blend(encoded, cover, mask_hw, *, bc_tile_cap=None, hw_tile_cap=None,
                  vmem_limit_bytes=None):
    """encoded, cover: (B, C, H, W); mask_hw: (H*W,) or (1, H*W) int32 keep mask."""
    B, C, H, W = encoded.shape
    BC, HW = B * C, H * W

    d_hw, d_bc, d_vmem = _default_tile_caps()
    hw_tile_cap = hw_tile_cap or d_hw
    bc_tile_cap = bc_tile_cap or d_bc
    if vmem_limit_bytes is None:
        vmem_limit_bytes = d_vmem

    itemsize = jnp.dtype(encoded.dtype).itemsize
    sub_base = max(8, 32 // itemsize)            # 8 rows f32, 16 bf16, 32 int8

    # Pad to (8,128)-aligned slab so tiles are always lane-dense (no masked vst,
    # no full-extent VMEM blowups on ragged shapes).
    BCp = _round_up(BC, sub_base)
    HWp = _round_up(HW, 128)

    enc2 = encoded.reshape(BC, HW)
    cov2 = cover.reshape(BC, HW)
    mask2 = mask_hw.reshape(1, HW).astype(jnp.int32)
    if BCp != BC or HWp != HW:
        enc2 = jnp.pad(enc2, ((0, BCp - BC), (0, HWp - HW)))
        cov2 = jnp.pad(cov2, ((0, BCp - BC), (0, HWp - HW)))
        mask2 = jnp.pad(mask2, ((0, 0), (0, HWp - HW)))

    tbc = _pick_tile(BCp, sub_base, bc_tile_cap)
    thw = _pick_tile(HWp, 128, hw_tile_cap)
    # Megacore: make sure the grid has >= 2 steps so both v7x TensorCores work.
    if (BCp // tbc) == 1 and (HWp // thw) == 1 and thw % 256 == 0:
        thw //= 2
    grid = (HWp // thw, BCp // tbc)              # spatial tiles outer, row tiles inner

    cost = pl.CostEstimate(
        flops=BCp * HWp,
        transcendentals=0,
        bytes_accessed=3 * BCp * HWp * itemsize + HWp * 4,
    )

    cp_kwargs = dict(dimension_semantics=("parallel", "parallel"))
    if vmem_limit_bytes is not None:
        cp_kwargs["vmem_limit_bytes"] = vmem_limit_bytes

    out = pl.pallas_call(
        _dropout_blend_kernel,
        out_shape=jax.ShapeDtypeStruct((BCp, HWp), encoded.dtype),
        grid=grid,
        in_specs=[
            pl.BlockSpec((1, thw), lambda j, i: (0, j)),      # spatial keep mask
            pl.BlockSpec((tbc, thw), lambda j, i: (i, j)),    # encoded tile
            pl.BlockSpec((tbc, thw), lambda j, i: (i, j)),    # cover tile
        ],
        out_specs=pl.BlockSpec((tbc, thw), lambda j, i: (i, j)),
        compiler_params=pltpu.CompilerParams(**cp_kwargs),
        cost_estimate=cost,
    )(mask2, enc2, cov2)

    if BCp != BC or HWp != HW:
        out = out[:BC, :HW]
    return out.reshape(B, C, H, W)


# ---------------------------------------------------------------------------
# Noise layers (JAX/Pallas versions)
# ---------------------------------------------------------------------------
class Identity:
    def __call__(self, encoded_and_cover, key):
        return encoded_and_cover


class Dropout:
    """Blend encoded and cover image with a random per-pixel keep mask."""

    def __init__(self, keep_ratio_range):
        self.keep_min, self.keep_max = keep_ratio_range

    def __call__(self, encoded_and_cover, key):
        encoded, cover = encoded_and_cover
        k_ratio, k_mask = jax.random.split(key)
        keep = jax.random.uniform(
            k_ratio, (), minval=self.keep_min, maxval=self.keep_max
        )
        H, W = encoded.shape[-2:]
        # Spatial keep mask shared across batch and channels (as in reference).
        mask = (jax.random.uniform(k_mask, (1, H * W)) < keep).astype(jnp.int32)
        noised = dropout_blend(encoded, cover, mask)
        return (noised, cover)


# ---------------------------------------------------------------------------
# Noiser
# ---------------------------------------------------------------------------
class Noiser:
    def __init__(self, noise_type):
        self.noise_layers = [Identity()]
        if noise_type == "no_noise":
            pass
        elif noise_type == "dropout":
            self.noise_layers.append(Dropout((0.25, 0.35)))
        else:
            # TODO(synk): 'combined', 'crop', 'cropout', 'resize', 'jpeg' not implemented.
            raise NotImplementedError(noise_type)

    def __call__(self, encoded_and_cover, key):
        keys = jax.random.split(key, len(self.noise_layers) + 1)
        # Mirrors the reference forward: layer[0] applied once, then all layers.
        encoded_and_cover = self.noise_layers[0](encoded_and_cover, keys[0])
        for i, layer in enumerate(self.noise_layers):
            encoded_and_cover = layer(encoded_and_cover, keys[i + 1])
        return encoded_and_cover


# ---------------------------------------------------------------------------
# Demo / smoke test
# ---------------------------------------------------------------------------
if __name__ == "__main__":
    B, C, H, W = 2, 4, 16, 16
    root = jax.random.PRNGKey(0)
    k_enc, k_cov, k_noise = jax.random.split(root, 3)

    encoded = jax.random.normal(k_enc, (B, C, H, W), dtype=jnp.float32)
    cover = jax.random.normal(k_cov, (B, C, H, W), dtype=jnp.float32)

    noiser = Noiser("dropout")
    noised, cover_out = noiser((encoded, cover), k_noise)

    noised = jax.block_until_ready(noised)
    cover_out = jax.block_until_ready(cover_out)

    # Sanity 1: every output pixel equals either the encoded or the cover pixel.
    is_enc = jnp.isclose(noised, encoded)
    is_cov = jnp.isclose(noised, cover)
    assert bool(jnp.all(is_enc | is_cov))

    # Sanity 2: the keep mask is shared across batch and channels.
    mask_sel = jnp.where(jnp.isclose(encoded, cover), True, is_enc)
    assert bool(jnp.all(mask_sel == mask_sel[0:1, 0:1, :, :]))

    # Sanity 3: 'no_noise' is a pass-through.
    idn, idc = Noiser("no_noise")((encoded, cover), k_noise)
    assert bool(jnp.all(idn == encoded)) and bool(jnp.all(idc == cover))

    assert noised.shape == (B, C, H, W)
    assert cover_out.shape == (B, C, H, W)

    print("KERNEL_OK")
</pallas_src>

<mosaic_0001>
module attributes {stable_mosaic.version = 11 : i64} {
  func.func @_dropout_blend_kernel(%arg0: i32, %arg1: i32, %arg2: memref<1x128xi32, #tpu.memory_space<vmem>>, %arg3: memref<8x128xf32, #tpu.memory_space<vmem>>, %arg4: memref<8x128xf32, #tpu.memory_space<vmem>>, %arg5: memref<8x128xf32, #tpu.memory_space<vmem>>) attributes {dimension_semantics = [#tpu.dimension_semantics<parallel>, #tpu.dimension_semantics<parallel>], iteration_bounds = array<i64: 2, 1>, scalar_prefetch = 0 : i64, scratch_operands = 0 : i64, tpu.core_type = #tpu.core_type<tc>, window_params = [{transform_indices = @transform_0, window_bounds = array<i64: 1, 128>}, {transform_indices = @transform_1, window_bounds = array<i64: 8, 128>}, {transform_indices = @transform_2, window_bounds = array<i64: 8, 128>}, {transform_indices = @transform_3, window_bounds = array<i64: 8, 128>}]} {
    %c0 = arith.constant 0 : index
    %c0_0 = arith.constant 0 : index
    %0 = vector.load %arg2[%c0, %c0_0] : memref<1x128xi32, #tpu.memory_space<vmem>>, vector<1x128xi32>
    %c0_i32 = arith.constant 0 : i32
    %1 = vector.broadcast %c0_i32 : i32 to vector<1x128xi32>
    %2 = arith.cmpi ne, %0, %1 : vector<1x128xi32>
    %c0_1 = arith.constant 0 : index
    %c0_2 = arith.constant 0 : index
    %3 = vector.load %arg3[%c0_1, %c0_2] : memref<8x128xf32, #tpu.memory_space<vmem>>, vector<8x128xf32>
    %c0_3 = arith.constant 0 : index
    %c0_4 = arith.constant 0 : index
    %4 = vector.load %arg4[%c0_3, %c0_4] : memref<8x128xf32, #tpu.memory_space<vmem>>, vector<8x128xf32>
    %5 = vector.shape_cast %2 : vector<1x128xi1> to vector<1x128xi1>
    %6 = vector.broadcast %5 : vector<1x128xi1> to vector<8x128xi1>
    %7 = arith.select %6, %3, %4 : vector<8x128xi1>, vector<8x128xf32>
    %c0_5 = arith.constant 0 : index
    %c0_6 = arith.constant 0 : index
    %8 = vector.load %arg5[%c0_5, %c0_6] : memref<8x128xf32, #tpu.memory_space<vmem>>, vector<8x128xf32>
    tpu.vector_store %arg5[%c0_5, %c0_6], %7 {strides = array<i32>} : memref<8x128xf32, #tpu.memory_space<vmem>>, vector<8x128xf32>,
    return
  }
  func.func @transform_0(%arg0: i32, %arg1: i32) -> (i32, i32) {
    %c0_i32 = arith.constant 0 : i32
    %c0_i32_0 = arith.constant 0 : i32
    return %c0_i32, %arg0 : i32, i32
  }
  func.func @transform_1(%arg0: i32, %arg1: i32) -> (i32, i32) {
    %c0_i32 = arith.constant 0 : i32
    return %arg1, %arg0 : i32, i32
  }
  func.func @transform_2(%arg0: i32, %arg1: i32) -> (i32, i32) {
    %c0_i32 = arith.constant 0 : i32
    return %arg1, %arg0 : i32, i32
  }
  func.func @transform_3(%arg0: i32, %arg1: i32) -> (i32, i32) {
    %c0_i32 = arith.constant 0 : i32
    return %arg1, %arg0 : i32, i32
  }
}

</mosaic_0001>

<llo_original>
// kernel: tpu_custom_call.1
$region0: #{tpu_custom_call.1}
  #allocation0 [shape = 'u32[]', space=smem, size = 0x4, offset = 0x4, fixed_abs, tag = 'smem constant byte address 0x4 - core index']
  #allocation1 [shape = 'u32[144,128]{1,0:T(1,128)}', space=vmem, size = 0x12000, scoped, tag = 'internal scratch']
  %s0 = inlined_call_operand.hbm [shape: s32[1,256], index: 0, kind: input, shape index: {}]
  %s1 = inlined_call_operand.hbm [shape: f32[8,256], index: 1, kind: input, shape index: {}]
  %s2 = inlined_call_operand.hbm [shape: f32[8,256], index: 2, kind: input, shape index: {}]
  %s3 = inlined_call_operand.hbm [shape: f32[8,256], index: 3, kind: output, shape index: {}]
  %s4 = sld [smem:[#allocation0]]
  $region57: #{tpu_custom_call.1} parent=0
    _
  %s6 = ssub.s32 1, %s4
  %s7 = scalar_select 0, %s6, %s4
  $region1: #{tpu_custom_call.1} parent=0
    #allocation2 [shape = 'u8[1024]{0}', space=vmem, size = 0x400, scoped, tag = 'input window, operand 0']
    #allocation3 [shape = 's32[2]{0}', space=sflag, size = 0x8, scoped, tag = 'scoped memory for tpu_custom_call.1']
    #allocation4 [shape = 's32[2]{0}', space=sflag, size = 0x8, scoped, tag = 'scoped memory for tpu_custom_call.1']
    #allocation5 [shape = 'u8[8192]{0}', space=vmem, size = 0x2000, scoped, tag = 'input window, operand 1']
    #allocation6 [shape = 's32[2]{0}', space=sflag, size = 0x8, scoped, tag = 'scoped memory for tpu_custom_call.1']
    #allocation7 [shape = 'u8[8192]{0}', space=vmem, size = 0x2000, scoped, tag = 'input window, operand 2']
    #allocation8 [shape = 'u8[8192]{0}', space=vmem, size = 0x2000, scoped, tag = 'output window, operand 0']
    %8 = vsyncpa [#allocation3], 0
    %s9 = scalar_lea.sflag [#allocation3], 1
    %10 = vsyncpa %s9, 0
    %11 = vsyncpa [#allocation6], 0
    %s12 = scalar_lea.sflag [#allocation6], 1
    %13 = vsyncpa %s12, 0
    %14 = vsyncpa [#allocation4], 0
    %s15 = scalar_lea.sflag [#allocation4], 1
    %16 = vsyncpa %s15, 0
    loop: start=0, step=1, limit=4
    $region2: #{tpu_custom_call.1} parent=1 // loop_pre_header
      _
    $region3: #{tpu_custom_call.1} parent=1 // loop_header
      %s18 = sphi 0, %s22
      %p19 = scmp.ge.s32.totalorder %s18, 4
      %s25 = sphi 0, %s37
      %s26 = sphi 0, %s33
      %s27 = sphi 0, %s25
      %s28 = sphi 0, %s26
      %s29 = sphi 0, %s27
      %s30 = sphi 0, %s28
      %s40 = sphi 0, %s42
      %s43 = sphi 0, %s40
      %s44 = sphi 0, %s43
      %s60 = sphi 0, %s44
      %s68 = sphi 0, %s70
      %s71 = sphi 0, %s68
      %s72 = sphi 0, %s71
      %s88 = sphi 0, %s72
      %s96 = sphi 0, %s98
      %s99 = sphi 0, %s96
      %s100 = sphi 0, %s99
      %s116 = sphi 0, %s100
      %s124 = sphi 0, %s126
      %s127 = sphi 0, %s124
      %s128 = sphi 0, %s127
      %s144 = sphi 0, %s128
    $region4: #{tpu_custom_call.1} parent=1 // loop_header_branch
      %21 = sbr.rel (%p19) target = $region8
    $region5: #{tpu_custom_call.1} parent=1 // loop_body
      %s23 = ssub.s32 %s18, 1
      %s24 = ssub.s32 %s18, 2
      %s31 = sadd.s32 1, %s26
      %p32 = scmp.ge.s32.totalorder %s31, 1
      %s33 = scalar_select %p32, 0, %s31
      %s34 = sadd.s32 1, %s25
      %s35 = scalar_select %p32, %s34, %s25
      %p36 = scmp.ge.s32.totalorder %s35, 2
      %s37 = scalar_select %p36, 0, %s35
      %s38 = ssub.s32 %s25, %s37
      %p39 = scmp.eq.s32.totalorder %s38, 0
      %s41 = sadd.s32 %s40, 1
      %s42 = scalar_select %p39, %s40, %s41
      %p45 = pneg %p39
      %p46 = scmp.eq.s32.totalorder %s18, 1
      %p47 = por %p45, %p46
      %p48 = scmp.ne.s32.totalorder %s40, %s43
      %p49 = scmp.eq.s32.totalorder %s18, 0
      %p50 = por %p48, %p49
      %p51 = scmp.ne.s32.totalorder %s40, %s43
      %p52 = scmp.eq.s32.totalorder %s23, 1
      %p53 = por %p51, %p52
      %p54 = scmp.ne.s32.totalorder %s43, %s44
      %p55 = scmp.eq.s32.totalorder %s23, 0
      %p56 = por %p54, %p55
      %p57 = scmp.ne.s32.totalorder %s43, %s44
      %p58 = scmp.eq.s32.totalorder %s24, 1
      %p59 = por %p57, %p58
      %p61 = scmp.ne.s32.totalorder %s44, %s60
      %p62 = scmp.eq.s32.totalorder %s24, 0
      %p63 = por %p61, %p62
      %s64 = ssub.s32 %s26, %s33
      %s65 = ssub.s32 %s25, %s37
      %s66 = sor.u32 %s64, %s65
      %p67 = scmp.eq.s32.totalorder %s66, 0
      %s69 = sadd.s32 %s68, 1
      %s70 = scalar_select %p67, %s68, %s69
      %p73 = pneg %p67
      %p74 = scmp.eq.s32.totalorder %s18, 1
      %p75 = por %p73, %p74
      %p76 = scmp.ne.s32.totalorder %s68, %s71
      %p77 = scmp.eq.s32.totalorder %s18, 0
      %p78 = por %p76, %p77
      %p79 = scmp.ne.s32.totalorder %s68, %s71
      %p80 = scmp.eq.s32.totalorder %s23, 1
      %p81 = por %p79, %p80
      %p82 = scmp.ne.s32.totalorder %s71, %s72
      %p83 = scmp.eq.s32.totalorder %s23, 0
      %p84 = por %p82, %p83
      %p85 = scmp.ne.s32.totalorder %s71, %s72
      %p86 = scmp.eq.s32.totalorder %s24, 1
      %p87 = por %p85, %p86
      %p89 = scmp.ne.s32.totalorder %s72, %s88
      %p90 = scmp.eq.s32.totalorder %s24, 0
      %p91 = por %p89, %p90
      %s92 = ssub.s32 %s26, %s33
      %s93 = ssub.s32 %s25, %s37
      %s94 = sor.u32 %s92, %s93
      %p95 = scmp.eq.s32.totalorder %s94, 0
      %s97 = sadd.s32 %s96, 1
      %s98 = scalar_select %p95, %s96, %s97
      %p101 = pneg %p95
      %p102 = scmp.eq.s32.totalorder %s18, 1
      %p103 = por %p101, %p102
      %p104 = scmp.ne.s32.totalorder %s96, %s99
      %p105 = scmp.eq.s32.totalorder %s18, 0
      %p106 = por %p104, %p105
      %p107 = scmp.ne.s32.totalorder %s96, %s99
      %p108 = scmp.eq.s32.totalorder %s23, 1
      %p109 = por %p107, %p108
      %p110 = scmp.ne.s32.totalorder %s99, %s100
      %p111 = scmp.eq.s32.totalorder %s23, 0
      %p112 = por %p110, %p111
      %p113 = scmp.ne.s32.totalorder %s99, %s100
      %p114 = scmp.eq.s32.totalorder %s24, 1
      %p115 = por %p113, %p114
      %p117 = scmp.ne.s32.totalorder %s100, %s116
      %p118 = scmp.eq.s32.totalorder %s24, 0
      %p119 = por %p117, %p118
      %s120 = ssub.s32 %s26, %s33
      %s121 = ssub.s32 %s25, %s37
      %s122 = sor.u32 %s120, %s121
      %p123 = scmp.eq.s32.totalorder %s122, 0
      %s125 = sadd.s32 %s124, 1
      %s126 = scalar_select %p123, %s124, %s125
      %p129 = pneg %p123
      %p130 = scmp.eq.s32.totalorder %s18, 1
      %p131 = por %p129, %p130
      %p132 = scmp.ne.s32.totalorder %s124, %s127
      %p133 = scmp.eq.s32.totalorder %s18, 0
      %p134 = por %p132, %p133
      %p135 = scmp.ne.s32.totalorder %s124, %s127
      %p136 = scmp.eq.s32.totalorder %s23, 1
      %p137 = por %p135, %p136
      %p138 = scmp.ne.s32.totalorder %s127, %s128
      %p139 = scmp.eq.s32.totalorder %s23, 0
      %p140 = por %p138, %p139
      %p141 = scmp.ne.s32.totalorder %s127, %s128
      %p142 = scmp.eq.s32.totalorder %s24, 1
      %p143 = por %p141, %p142
      %p145 = scmp.ne.s32.totalorder %s128, %s144
      %p146 = scmp.eq.s32.totalorder %s24, 0
      %p147 = por %p145, %p146
      %p148 = scmp.le.s32.totalorder 1, %s18
      %p149 = scmp.lt.s32.totalorder %s18, 3
      %p150 = pnand %p148, %p149
      %p151 = pneg %p150
      // Predicated region
      $region9: #{tpu_custom_call.1} parent=5 // pred_check
        _
      $region10: #{tpu_custom_call.1} parent=5 // pred_check_branch
        %153 = sbr.rel (%p150) target = $region12
      $region11: #{tpu_custom_call.1} parent=5 // pred_region
        %s154 = ssub.s32 %s18, 1
      $region12: #{tpu_custom_call.1} parent=5 // pred_fallthru
        _
      %p155 = scmp.lt.s32.totalorder %s18, 2
      // Predicated region
      $region13: #{tpu_custom_call.1} parent=5 // pred_check
        %p156 = pneg %p155
      $region14: #{tpu_custom_call.1} parent=5 // pred_check_branch
        %158 = sbr.rel (%p156) target = $region16
      $region15: #{tpu_custom_call.1} parent=5 // pred_region
        // Predicated region
        $region17: #{tpu_custom_call.1} parent=15 // pred_check
          %p159 = pneg %p50
        $region18: #{tpu_custom_call.1} parent=15 // pred_check_branch
          %161 = sbr.rel (%p159) target = $region20
        $region19: #{tpu_custom_call.1} parent=15 // pred_region
          %s162 = sand.u32 %s40, 1
          %s163 = scalar_lea.sflag [#allocation3], %s162
          %s164 = sand.u32 %s40, 1
          %s165 = scalar_lea.vmem [#allocation2], %s164
          %s167 = ssub.s32 16, 16
          %168 = vsyncadd %s163, %s167
          %s169 = smul.addr %s25, 16
          %s170 = scalar_lea.hbm %s0, %s169
          %s172 = sshll.u32 %s165, 4
          %s173 = int_to_ptr.vmem [resolvable:$true] %s172
          %175 = dma.hbm_to_vmem [thread:$0]  %s170, 16, %s173, %s163
        $region20: #{tpu_custom_call.1} parent=15 // pred_fallthru
          _
        // Predicated region
        $region21: #{tpu_custom_call.1} parent=15 // pred_check
          %p176 = pneg %p78
        $region22: #{tpu_custom_call.1} parent=15 // pred_check_branch
          %178 = sbr.rel (%p176) target = $region24
        $region23: #{tpu_custom_call.1} parent=15 // pred_region
          %s179 = sand.u32 %s18, 1
          %s180 = scalar_lea.sflag [#allocation6], %s179
          %s181 = sand.u32 %s68, 1
          %s182 = smul.addr %s181, 8
          %s183 = scalar_lea.vmem [#allocation5], %s182
          %s185 = ssub.s32 128, 128
          %186 = vsyncadd %s180, %s185
          %s187 = smul.addr %s26, 2
          %s188 = sadd.s32 %s25, %s187
          %s189 = smul.addr %s188, 128
          %s190 = scalar_lea.hbm %s1, %s189
          %s192 = sshll.u32 %s183, 4
          %s193 = int_to_ptr.vmem [resolvable:$true] %s192
          %195 = dma.hbm_to_vmem [thread:$0]  %s190, 128, %s193, %s180
        $region24: #{tpu_custom_call.1} parent=15 // pred_fallthru
          _
        // Predicated region
        $region25: #{tpu_custom_call.1} parent=15 // pred_check
          %p196 = pneg %p106
        $region26: #{tpu_custom_call.1} parent=15 // pred_check_branch
          %198 = sbr.rel (%p196) target = $region28
        $region27: #{tpu_custom_call.1} parent=15 // pred_region
          %s199 = sand.u32 %s18, 1
          %s200 = scalar_lea.sflag [#allocation6], %s199
          %s201 = sand.u32 %s96, 1
          %s202 = smul.addr %s201, 8
          %s203 = scalar_lea.vmem [#allocation7], %s202
          %s205 = ssub.s32 128, 128
          %206 = vsyncadd %s200, %s205
          %s207 = smul.addr %s26, 2
          %s208 = sadd.s32 %s25, %s207
          %s209 = smul.addr %s208, 128
          %s210 = scalar_lea.hbm %s2, %s209
          %s212 = sshll.u32 %s203, 4
          %s213 = int_to_ptr.vmem [resolvable:$true] %s212
          %215 = dma.hbm_to_vmem [thread:$0]  %s210, 128, %s213, %s200
        $region28: #{tpu_custom_call.1} parent=15 // pred_fallthru
          _
      $region16: #{tpu_custom_call.1} parent=5 // pred_fallthru
        _
      %p216 = scmp.le.s32.totalorder 1, %s18
      %p217 = scmp.lt.s32.totalorder %s18, 3
      %p218 = pnand %p216, %p217
      %p219 = pneg %p218
      // Predicated region
      $region29: #{tpu_custom_call.1} parent=5 // pred_check
        _
      $region30: #{tpu_custom_call.1} parent=5 // pred_check_branch
        %221 = sbr.rel (%p218) target = $region32
      $region31: #{tpu_custom_call.1} parent=5 // pred_region
        %s222 = ssub.s32 %s18, 1
        %s223 = sand.u32 %s43, 1
        %s224 = scalar_lea.sflag [#allocation3], %s223
        %s225 = sand.u32 %s43, 1
        %s226 = scalar_lea.vmem [#allocation2], %s225
        // Predicated region
        $region33: #{tpu_custom_call.1} parent=31 // pred_check
          %p227 = pneg %p56
        $region34: #{tpu_custom_call.1} parent=31 // pred_check_branch
          %229 = sbr.rel (%p227) target = $region36
        $region35: #{tpu_custom_call.1} parent=31 // pred_region
          %230 = dma.done %s224, 16
        $region36: #{tpu_custom_call.1} parent=31 // pred_fallthru
          _
        %s231 = sand.u32 %s23, 1
        %s232 = scalar_lea.sflag [#allocation6], %s231
        %s233 = sand.u32 %s71, 1
        %s234 = smul.addr %s233, 8
        %s235 = scalar_lea.vmem [#allocation5], %s234
        // Predicated region
        $region37: #{tpu_custom_call.1} parent=31 // pred_check
          %p236 = pneg %p84
        $region38: #{tpu_custom_call.1} parent=31 // pred_check_branch
          %238 = sbr.rel (%p236) target = $region40
        $region39: #{tpu_custom_call.1} parent=31 // pred_region
          %239 = dma.done %s232, 128
        $region40: #{tpu_custom_call.1} parent=31 // pred_fallthru
          _
        %s240 = sand.u32 %s23, 1
        %s241 = scalar_lea.sflag [#allocation6], %s240
        %s242 = sand.u32 %s99, 1
        %s243 = smul.addr %s242, 8
        %s244 = scalar_lea.vmem [#allocation7], %s243
        // Predicated region
        $region41: #{tpu_custom_call.1} parent=31 // pred_check
          %p245 = pneg %p112
        $region42: #{tpu_custom_call.1} parent=31 // pred_check_branch
          %247 = sbr.rel (%p245) target = $region44
        $region43: #{tpu_custom_call.1} parent=31 // pred_region
          %248 = dma.done %s241, 128
        $region44: #{tpu_custom_call.1} parent=31 // pred_fallthru
          _
        %s249 = sand.u32 %s43, 1
        %s250 = scalar_lea.sflag [#allocation3], %s249
        %s251 = sand.u32 %s43, 1
        %s252 = scalar_lea.vmem [#allocation2], %s251
        %p253 = pneg %p56
        %p254 = pneg %p53
        %s255 = sand.u32 %s23, 1
        %s256 = scalar_lea.sflag [#allocation6], %s255
        %s257 = sand.u32 %s71, 1
        %s258 = smul.addr %s257, 8
        %s259 = scalar_lea.vmem [#allocation5], %s258
        %p260 = pneg %p84
        %p261 = pneg %p81
        %s262 = sand.u32 %s23, 1
        %s263 = scalar_lea.sflag [#allocation6], %s262
        %s264 = sand.u32 %s99, 1
        %s265 = smul.addr %s264, 8
        %s266 = scalar_lea.vmem [#allocation7], %s265
        %p267 = pneg %p112
        %p268 = pneg %p109
        %p269 = pneg %p140
        %p270 = pneg %p137
        %s271 = sand.u32 %s127, 1
        %s272 = scalar_lea.sflag [#allocation4], %s271
        %s273 = sand.u32 %s127, 1
        %s274 = smul.addr %s273, 8
        %s275 = scalar_lea.vmem [#allocation8], %s274
        %v276 = vld [vmem:[%s226] sm:$0x1]
        %vm277 = vcmp.ne.s32.totalorder %v276, 0
        %v278 = vld [vmem:[%s235] sm:$0xff]
        %v279 = vld [vmem:[%s244] sm:$0xff]
        %v280 = vsel %vm277, 1, 0
        %v281 = vlaneseq
        %v282 = vshrl.u32 %v281, 7
        %v283 = vsub.s32 0, %v282
        %v284 = vrot.slane %v280, %v283
        %vm285 = vcmp.eq.s32.totalorder %v284, 1
        %v286 = vsel %vm285, %v278, %v279
        %287 = vst [vmem:[%s275] sm:$0xff] %v286
        %s288 = sand.u32 %s127, 1
        %s289 = scalar_lea.sflag [#allocation4], %s288
        %s290 = sand.u32 %s127, 1
        %s291 = smul.addr %s290, 8
        %s292 = scalar_lea.vmem [#allocation8], %s291
        // Predicated region
        $region45: #{tpu_custom_call.1} parent=31 // pred_check
          %p293 = pneg %p137
        $region46: #{tpu_custom_call.1} parent=31 // pred_check_branch
          %295 = sbr.rel (%p293) target = $region48
        $region47: #{tpu_custom_call.1} parent=31 // pred_region
          %s297 = ssub.s32 128, 128
          %298 = vsyncadd %s289, %s297
          %s299 = smul.addr %s28, 2
          %s300 = sadd.s32 %s27, %s299
          %s301 = smul.addr %s300, 128
          %s302 = scalar_lea.hbm %s3, %s301
          %s304 = sshll.u32 %s292, 4
          %s305 = int_to_ptr.vmem [resolvable:$true] %s304
          %307 = dma.vmem_to_hbm [thread:$0]  %s305, 128, %s302, %s289
        $region48: #{tpu_custom_call.1} parent=31 // pred_fallthru
          _
      $region32: #{tpu_custom_call.1} parent=5 // pred_fallthru
        _
      %p308 = scmp.le.s32.totalorder 2, %s18
      // Predicated region
      $region49: #{tpu_custom_call.1} parent=5 // pred_check
        %p309 = pneg %p308
      $region50: #{tpu_custom_call.1} parent=5 // pred_check_branch
        %311 = sbr.rel (%p309) target = $region52
      $region51: #{tpu_custom_call.1} parent=5 // pred_region
        %s312 = ssub.s32 %s18, 2
        // Predicated region
        $region53: #{tpu_custom_call.1} parent=51 // pred_check
          %p313 = pneg %p143
        $region54: #{tpu_custom_call.1} parent=51 // pred_check_branch
          %315 = sbr.rel (%p313) target = $region56
        $region55: #{tpu_custom_call.1} parent=51 // pred_region
          %s316 = sand.u32 %s128, 1
          %s317 = scalar_lea.sflag [#allocation4], %s316
          %s318 = sand.u32 %s128, 1
          %s319 = smul.addr %s318, 8
          %s320 = scalar_lea.vmem [#allocation8], %s319
          %321 = dma.done %s317, 128
        $region56: #{tpu_custom_call.1} parent=51 // pred_fallthru
          _
      $region52: #{tpu_custom_call.1} parent=5 // pred_fallthru
        _
    $region6: #{tpu_custom_call.1} parent=1 // loop_footer
      %s22 = sadd.s32 1, %s18
    $region7: #{tpu_custom_call.1} parent=1 // loop_footer_branch
      %17 = sbr.rel target = $region3
    $region8: #{tpu_custom_call.1} parent=1 // loop_exit
      _
    %322 = vsyncpa [#allocation3], 1
    %s323 = scalar_lea.sflag [#allocation3], 1
    %324 = vsyncpa %s323, 1
    %325 = vsyncpa [#allocation6], 1
    %s326 = scalar_lea.sflag [#allocation6], 1
    %327 = vsyncpa %s326, 1
    %328 = vsyncpa [#allocation4], 1
    %s329 = scalar_lea.sflag [#allocation4], 1
    %330 = vsyncpa %s329, 1

</llo_original>
